<compile_context>
chip_gen: v5e
topology: v5e:2x2
jax: 0.10.0
libtpu: 0.0.40
codegen_flags: <defaults>
</compile_context>

<pallas_src>
import jax
import jax.numpy as jnp
from jax import lax
from jax.experimental import pallas as pl
from jax.experimental.pallas import tpu as pltpu


def _round_up(v: int, m: int) -> int:
    return (v + m - 1) // m * m


def _cdiv(a: int, b: int) -> int:
    return (a + b - 1) // b


def _vmem_cap_bytes() -> int:
    """Generation-aware VMEM cap (~85% of physical); conservative 64 MiB fallback (v7x)."""
    try:
        info = pltpu.get_tpu_info()
        phys = int(getattr(info, "vmem_capacity_bytes", 0)) or (64 << 20)
    except Exception:
        phys = 64 << 20
    return int(phys * 0.85)


# ------------------------------- kernels ----------------------------------


def _hr_linear_kernel(x_ref, w_ref, b_ref, o_ref, acc_ref):
    # x_ref:   (tm, tk)  input row/K tile
    # w_ref:   (tn, tk)  weight tile in native (D2, D1) layout
    # b_ref:   (1, tn)   bias row tile
    # o_ref:   (tm, tn)  output tile
    # acc_ref: (tm, tn)  f32 accumulator scratch (persists across K steps)
    k = pl.program_id(2)

    @pl.when(k == 0)
    def _():
        acc_ref[...] = jnp.zeros_like(acc_ref)

    # Contract the last (lane-dense) axes of both tiles: x @ w.T on the MXU as a
    # transposed-RHS matmul — no XLU transpose, no materialized weight.T.
    acc_ref[...] += lax.dot_general(
        x_ref[...], w_ref[...],
        dimension_numbers=(((1,), (1,)), ((), ())),
        preferred_element_type=jnp.float32,
    )

    @pl.when(k == pl.num_programs(2) - 1)
    def _():
        o_ref[...] = (acc_ref[...] + b_ref[...].astype(jnp.float32)).astype(o_ref.dtype)


def _hr_linear_single_block_kernel(x_ref, w_ref, b_ref, o_ref):
    # Whole problem in VMEM: one matmul, bias add, cast, store.
    acc = lax.dot_general(
        x_ref[...], w_ref[...],
        dimension_numbers=(((1,), (1,)), ((), ())),
        preferred_element_type=jnp.float32,
    )
    o_ref[...] = (acc + b_ref[...].astype(jnp.float32)).astype(o_ref.dtype)


# ------------------------------- wrapper -----------------------------------


def hr_linear(x: jax.Array, weight: jax.Array, bias: jax.Array, *,
              compute_dtype=jnp.bfloat16,
              tm: int | None = None, tn: int | None = None, tk: int | None = None,
              allow_single_block: bool = True) -> jax.Array:
    """y = x @ weight.T + bias, matching torch.nn.functional.linear.

    compute_dtype: dtype the MXU consumes (default bf16; accumulation is f32,
    output is returned in x.dtype).
    """
    N, D1 = x.shape
    D2, D1w = weight.shape
    assert D1 == D1w, "weight inner dim must match x"
    assert bias.shape == (D2,)

    out_dtype = x.dtype
    compute_dtype = jnp.dtype(compute_dtype)
    xc = x.astype(compute_dtype) if x.dtype != compute_dtype else x
    wc = weight.astype(compute_dtype) if weight.dtype != compute_dtype else weight
    bc = bias.astype(jnp.float32)  # bias added in f32 accumulation

    c_item = compute_dtype.itemsize
    o_item = jnp.dtype(out_dtype).itemsize
    # Sublane alignment: 8 for 32-bit, 16 for 16-bit, 32 for 8-bit packing.
    sub = 8 * max(1, 4 // c_item)

    vmem_cap = _vmem_cap_bytes()

    # ---------------- single-block fast path (small layers) ----------------
    N_s = _round_up(N, sub)
    D1_s = _round_up(D1, 128)
    D2_s = _round_up(D2, 128)
    fast_bytes = ((N_s * D1_s + D2_s * D1_s) * c_item
                  + D2_s * 4
                  + N_s * D2_s * (o_item + 4))  # out + f32 intermediate margin
    if allow_single_block and fast_bytes <= min(12 << 20, vmem_cap // 2):
        x_p = xc if (N_s == N and D1_s == D1) else jnp.pad(xc, ((0, N_s - N), (0, D1_s - D1)))
        w_p = wc if (D2_s == D2 and D1_s == D1) else jnp.pad(wc, ((0, D2_s - D2), (0, D1_s - D1)))
        b_p = (bc if D2_s == D2 else jnp.pad(bc, (0, D2_s - D2))).reshape(1, D2_s)
        out = pl.pallas_call(
            _hr_linear_single_block_kernel,
            out_shape=jax.ShapeDtypeStruct((N_s, D2_s), out_dtype),
            in_specs=[pl.BlockSpec(memory_space=pltpu.MemorySpace.VMEM)] * 3,
            out_specs=pl.BlockSpec(memory_space=pltpu.MemorySpace.VMEM),
            compiler_params=pltpu.CompilerParams(
                vmem_limit_bytes=int(min(max(4 * fast_bytes, 32 << 20), vmem_cap))),
        )(x_p, w_p, b_p)
        return out[:N, :D2] if (N_s != N or D2_s != D2) else out

    # ---------------------------- gridded path -----------------------------
    # MXU-/VMEM-friendly defaults (256-multiples keep v6e/v7x 2x256^2 arrays full).
    if tm is None:
        tm = 512
    if tn is None:
        tn = 512
    if tk is None:
        tk = 2048 if c_item <= 2 else 1024

    def pick(dim: int, max_tile: int, align: int) -> int:
        # Pick a tile <= max_tile that divides the padded extent tightly
        # (limits padding waste when dim is just above a tile multiple).
        nt = max(1, _cdiv(dim, max_tile))
        t = _round_up(_cdiv(dim, nt), align)
        return min(t, _round_up(dim, align))

    tm_e = pick(N, tm, sub)
    tn_e = pick(D2, tn, 128)
    tk_e = pick(D1, tk, 128)

    N_p = _round_up(N, tm_e)
    D2_p = _round_up(D2, tn_e)
    D1_p = _round_up(D1, tk_e)

    # v7x has 2 TensorCores sharded over the 'parallel' grid axes: guarantee at
    # least two output tiles when the output is wide enough to split.
    if (N_p // tm_e) * (D2_p // tn_e) < 2 and D2_p >= 256:
        tn_e = _round_up(_cdiv(D2, 2), 128)
        D2_p = _round_up(D2, tn_e)

    x_p = xc if (N_p == N and D1_p == D1) else jnp.pad(xc, ((0, N_p - N), (0, D1_p - D1)))
    w_p = wc if (D2_p == D2 and D1_p == D1) else jnp.pad(wc, ((0, D2_p - D2), (0, D1_p - D1)))
    b_p = (bc if D2_p == D2 else jnp.pad(bc, (0, D2_p - D2))).reshape(1, D2_p)

    grid = (N_p // tm_e, D2_p // tn_e, D1_p // tk_e)

    # VMEM: double-buffered input/output tiles + f32 accumulator + headroom;
    # clamped to the generation-aware cap but never below the actual need.
    vmem_need = (2 * (tm_e * tk_e + tn_e * tk_e + tn_e) * c_item
                 + 2 * tm_e * tn_e * o_item
                 + tm_e * tn_e * 4
                 + (2 << 20))
    vmem_limit = min(max(int(1.25 * vmem_need), 32 << 20), vmem_cap)
    vmem_limit = max(vmem_limit, vmem_need)

    out = pl.pallas_call(
        _hr_linear_kernel,
        out_shape=jax.ShapeDtypeStruct((N_p, D2_p), out_dtype),
        grid_spec=pltpu.PrefetchScalarGridSpec(
            num_scalar_prefetch=0,
            grid=grid,
            in_specs=[
                pl.BlockSpec((tm_e, tk_e), lambda i, j, k: (i, k)),   # x tile
                pl.BlockSpec((tn_e, tk_e), lambda i, j, k: (j, k)),   # weight tile (D2, D1)
                # TODO(synk): sweep pipeline_mode=pl.Buffered(3) on the weight spec if
                # profiling shows exposed DMA for long-K / small-tm shapes.
                pl.BlockSpec((1, tn_e), lambda i, j, k: (0, j)),      # bias row tile
            ],
            out_specs=pl.BlockSpec((tm_e, tn_e), lambda i, j, k: (i, j)),
            scratch_shapes=[pltpu.VMEM((tm_e, tn_e), jnp.float32)],
        ),
        compiler_params=pltpu.CompilerParams(
            dimension_semantics=("parallel", "parallel", "arbitrary"),
            vmem_limit_bytes=int(vmem_limit),
        ),
        cost_estimate=pl.CostEstimate(
            flops=int(2 * N_p * D1_p * D2_p),
            transcendentals=0,
            bytes_accessed=int(N_p * D1_p * c_item * grid[1]       # x re-read per j tile
                               + D2_p * D1_p * c_item * grid[0]    # weight re-read per i tile
                               + D2_p * 4 * grid[0]                # bias per i tile
                               + N_p * D2_p * o_item),             # output written once
        ),
    )(x_p, w_p, b_p)

    if N_p != N or D2_p != D2:
        out = out[:N, :D2]
    return out

    # TODO(synk): optional v7x fp8 weight path (fp8 weight tiles, bf16 activations,
    # f32 accumulation) behind an explicit flag — not numerically drop-in.


if __name__ == "__main__":
    # Deterministic synthetic parameters (HRLinear.__init__ just stores weight/bias).
    key = jax.random.PRNGKey(0)

    # --- small demo shape: default bf16 path (single-block fast path) ---
    N, D1, D2 = 16, 32, 64
    kx, kw, kb = jax.random.split(key, 3)
    x = jax.random.normal(kx, (N, D1), dtype=jnp.float32)
    weight = jax.random.normal(kw, (D2, D1), dtype=jnp.float32) * 0.1
    bias = jax.random.normal(kb, (D2,), dtype=jnp.float32)

    y = jax.block_until_ready(hr_linear(x, weight, bias))
    y_ref = x @ weight.T + bias
    assert y.shape == (N, D2)
    assert jnp.allclose(y, y_ref, atol=5e-2, rtol=5e-2), "bf16 fast-path mismatch"

    # --- slightly larger shape, f32 compute, forced gridded/accumulator path ---
    N2, D12, D22 = 48, 384, 320
    k2x, k2w, k2b = jax.random.split(jax.random.PRNGKey(0), 3)
    x2 = jax.random.normal(k2x, (N2, D12), dtype=jnp.float32)
    w2 = jax.random.normal(k2w, (D22, D12), dtype=jnp.float32) * 0.1
    b2 = jax.random.normal(k2b, (D22,), dtype=jnp.float32)

    y2 = jax.block_until_ready(
        hr_linear(x2, w2, b2, compute_dtype=jnp.float32,
                  tm=16, tn=128, tk=128, allow_single_block=False))
    y2_ref = x2 @ w2.T + b2
    assert y2.shape == (N2, D22)
    assert jnp.allclose(y2, y2_ref, atol=1e-4, rtol=1e-4), "f32 grid-path mismatch"

    print("KERNEL_OK")
</pallas_src>

<mosaic_0001>
module attributes {stable_mosaic.version = 11 : i64} {
  func.func @_hr_linear_single_block_kernel(%arg0: memref<16x128xbf16, #tpu.memory_space<vmem>>, %arg1: memref<128x128xbf16, #tpu.memory_space<vmem>>, %arg2: memref<1x128xf32, #tpu.memory_space<vmem>>, %arg3: memref<16x128xf32, #tpu.memory_space<vmem>>) attributes {dimension_semantics = [], scalar_prefetch = 0 : i64, scratch_operands = 0 : i64, tpu.core_type = #tpu.core_type<tc>} {
    %c0 = arith.constant 0 : index
    %c0_0 = arith.constant 0 : index
    %0 = vector.load %arg0[%c0, %c0_0] : memref<16x128xbf16, #tpu.memory_space<vmem>>, vector<16x128xbf16>
    %c0_1 = arith.constant 0 : index
    %c0_2 = arith.constant 0 : index
    %1 = vector.load %arg1[%c0_1, %c0_2] : memref<128x128xbf16, #tpu.memory_space<vmem>>, vector<128x128xbf16>
    %cst = arith.constant dense<0.000000e+00> : vector<16x128xf32>
    %2 = tpu.matmul %0, %1, %cst {dimension_numbers = #tpu.dot_dimension_numbers<[1], [1], [0], [0], [0, 0, 1, 0], [], []>} : vector<16x128xbf16>, vector<128x128xbf16>, vector<16x128xf32> -> vector<16x128xf32>
    %c0_3 = arith.constant 0 : index
    %c0_4 = arith.constant 0 : index
    %3 = vector.load %arg2[%c0_3, %c0_4] : memref<1x128xf32, #tpu.memory_space<vmem>>, vector<1x128xf32>
    %4 = vector.broadcast %3 : vector<1x128xf32> to vector<16x128xf32>
    %5 = arith.addf %2, %4 : vector<16x128xf32>
    %c0_5 = arith.constant 0 : index
    %c0_6 = arith.constant 0 : index
    %6 = vector.load %arg3[%c0_5, %c0_6] : memref<16x128xf32, #tpu.memory_space<vmem>>, vector<16x128xf32>
    tpu.vector_store %arg3[%c0_5, %c0_6], %5 {strides = array<i32>} : memref<16x128xf32, #tpu.memory_space<vmem>>, vector<16x128xf32>,
    return
  }
}

</mosaic_0001>

<llo_original>
// kernel: tpu_custom_call.1
$region0: #{tpu_custom_call.1}
  #allocation0 [shape = 'u32[]', space=smem, size = 0x4, offset = 0x4, fixed_abs, tag = 'smem constant byte address 0x4 - core index']
  #allocation1 [shape = 'u32[72,128]{1,0:T(1,128)}', space=vmem, size = 0x9000, scoped, tag = 'internal scratch']
  %s0 = inlined_call_operand.hbm [shape: bf16[16,128], index: 0, kind: input, shape index: {}]
  %s1 = inlined_call_operand.hbm [shape: bf16[128,128], index: 1, kind: input, shape index: {}]
  %s2 = inlined_call_operand.vmem [shape: f32[1,128], index: 2, kind: input, shape index: {}]
  %s3 = inlined_call_operand.hbm [shape: f32[16,128], index: 3, kind: output, shape index: {}]
  %s4 = sld [smem:[#allocation0]]
  $region30: #{tpu_custom_call.1} parent=0
    _
  %s6 = ssub.s32 1, %s4
  %s7 = scalar_select 0, %s6, %s4
  $region1: #{tpu_custom_call.1} parent=0
    #allocation2 [shape = 'u8[4096]{0}', space=vmem, size = 0x1000, scoped, tag = 'input window, operand 0, single buffered']
    #allocation3 [shape = 's32[1]{0}', space=sflag, size = 0x4, scoped, tag = 'scoped memory for tpu_custom_call.1']
    #allocation4 [shape = 's32[1]{0}', space=sflag, size = 0x4, scoped, tag = 'scoped memory for tpu_custom_call.1']
    #allocation5 [shape = 'u8[32768]{0}', space=vmem, size = 0x8000, scoped, tag = 'input window, operand 1, single buffered']
    #allocation6 [shape = 's32[1]{0}', space=sflag, size = 0x4, scoped, tag = 'scoped memory for tpu_custom_call.1']
    #allocation7 [shape = 'u8[8192]{0}', space=vmem, size = 0x2000, scoped, tag = 'output window, operand 0, single buffered']
    %8 = vsyncpa [#allocation3], 0
    %9 = vsyncpa [#allocation6], 0
    %10 = vsyncpa [#allocation4], 0
    // Predicated region
    $region2: #{tpu_custom_call.1} parent=1 // pred_check
      _
    $region3: #{tpu_custom_call.1} parent=1 // pred_check_branch
      %12 = sbr.rel (0) target = $region5
    $region4: #{tpu_custom_call.1} parent=1 // pred_region
      %14 = vsyncadd [#allocation3], 0
      %s15 = sshll.u32 %s0, 4
      %s16 = int_to_ptr.hbm [resolvable:$true] %s15
      %s17 = sshll.u32 [#allocation2], 4
      %s18 = int_to_ptr.vmem [resolvable:$true] %s17
      %23 = dma.hbm_to_vmem [thread:$0]  %s16, 128, %s18, [#allocation3], 64, 64, 4
    $region5: #{tpu_custom_call.1} parent=1 // pred_fallthru
      _
    // Predicated region
    $region6: #{tpu_custom_call.1} parent=1 // pred_check
      _
    $region7: #{tpu_custom_call.1} parent=1 // pred_check_branch
      %25 = sbr.rel (0) target = $region9
    $region8: #{tpu_custom_call.1} parent=1 // pred_region
      %27 = vsyncadd [#allocation6], 0
      %s28 = sshll.u32 %s1, 4
      %s29 = int_to_ptr.hbm [resolvable:$true] %s28
      %s30 = sshll.u32 [#allocation5], 4
      %s31 = int_to_ptr.vmem [resolvable:$true] %s30
      %36 = dma.hbm_to_vmem [thread:$0]  %s29, 1024, %s31, [#allocation6], 64, 64, 4
    $region9: #{tpu_custom_call.1} parent=1 // pred_fallthru
      _
    // Predicated region
    $region10: #{tpu_custom_call.1} parent=1 // pred_check
      _
    $region11: #{tpu_custom_call.1} parent=1 // pred_check_branch
      %38 = sbr.rel (0) target = $region13
    $region12: #{tpu_custom_call.1} parent=1 // pred_region
      _
    $region13: #{tpu_custom_call.1} parent=1 // pred_fallthru
      _
    // Predicated region
    $region14: #{tpu_custom_call.1} parent=1 // pred_check
      _
    $region15: #{tpu_custom_call.1} parent=1 // pred_check_branch
      %40 = sbr.rel (0) target = $region17
    $region16: #{tpu_custom_call.1} parent=1 // pred_region
      %42 = dma.done [#allocation3], 128
    $region17: #{tpu_custom_call.1} parent=1 // pred_fallthru
      _
    // Predicated region
    $region18: #{tpu_custom_call.1} parent=1 // pred_check
      _
    $region19: #{tpu_custom_call.1} parent=1 // pred_check_branch
      %44 = sbr.rel (0) target = $region21
    $region20: #{tpu_custom_call.1} parent=1 // pred_region
      %46 = dma.done [#allocation6], 1024
    $region21: #{tpu_custom_call.1} parent=1 // pred_fallthru
      _
    %v47 = vld [vmem:[#allocation2] sm:$0xf]
    %v48 = vld [vmem:[#allocation2 + $0x4] sm:$0xf]
    %v49 = vld [vmem:[#allocation5] sm:$0xf]
    %v50 = vld [vmem:[#allocation5 + $0x4] sm:$0xf]
    %v51 = vld [vmem:[#allocation5 + $0x8] sm:$0xf]
    %v52 = vld [vmem:[#allocation5 + $0xc] sm:$0xf]
    %v53 = vld [vmem:[#allocation5 + $0x10] sm:$0xf]
    %v54 = vld [vmem:[#allocation5 + $0x14] sm:$0xf]
    %v55 = vld [vmem:[#allocation5 + $0x18] sm:$0xf]
    %v56 = vld [vmem:[#allocation5 + $0x1c] sm:$0xf]
    %v57 = vld [vmem:[#allocation5 + $0x20] sm:$0xf]
    %v58 = vld [vmem:[#allocation5 + $0x24] sm:$0xf]
    %v59 = vld [vmem:[#allocation5 + $0x28] sm:$0xf]
    %v60 = vld [vmem:[#allocation5 + $0x2c] sm:$0xf]
    %v61 = vld [vmem:[#allocation5 + $0x30] sm:$0xf]
    %v62 = vld [vmem:[#allocation5 + $0x34] sm:$0xf]
    %v63 = vld [vmem:[#allocation5 + $0x38] sm:$0xf]
    %v64 = vld [vmem:[#allocation5 + $0x3c] sm:$0xf]
    %v65 = vld [vmem:[%s2] sm:$0x1]
    %v67 = vperm.slane %v65, 0
    %v71 = vunpack.c.l.b16 %v47
    %v72 = vunpack.c.l.b16 %v48
    %v73 = vpack.c.b16 %v72, %v71
    %v91 = vunpack.c.l.b16 %v49
    %v92 = vunpack.c.l.b16 %v50
    %v93 = vunpack.c.l.b16 %v51
    %v94 = vunpack.c.l.b16 %v52
    %v95 = vunpack.c.l.b16 %v53
    %v96 = vunpack.c.l.b16 %v54
    %v97 = vunpack.c.l.b16 %v55
    %v98 = vunpack.c.l.b16 %v56
    %v99 = vunpack.c.l.b16 %v57
    %v100 = vunpack.c.l.b16 %v58
    %v101 = vunpack.c.l.b16 %v59
    %v102 = vunpack.c.l.b16 %v60
    %v103 = vunpack.c.l.b16 %v61
    %v104 = vunpack.c.l.b16 %v62
    %v105 = vunpack.c.l.b16 %v63
    %v106 = vunpack.c.l.b16 %v64
    %v107 = vpack.c.b16 %v92, %v91
    %v108 = vpack.c.b16 %v94, %v93
    %v109 = vpack.c.b16 %v96, %v95
    %v110 = vpack.c.b16 %v98, %v97
    %v111 = vpack.c.b16 %v100, %v99
    %v112 = vpack.c.b16 %v102, %v101
    %v113 = vpack.c.b16 %v104, %v103
    %v114 = vpack.c.b16 %v106, %v105
    %123 = vmatpush.bf16.xpose.msra.mxu0 %v114
    %124 = vmatpush.bf16.xpose.msra.mxu0 %v113
    %125 = vmatpush.bf16.xpose.msra.mxu0 %v112
    %126 = vmatpush.bf16.xpose.msra.mxu0 %v111
    %127 = vmatpush.bf16.xpose.msra.mxu0 %v110
    %128 = vmatpush.bf16.xpose.msra.mxu0 %v109
    %129 = vmatpush.bf16.xpose.msra.mxu0 %v108
    %130 = vmatpush.bf16.xpose.msra.mxu0 %v107
    %131 = vmatmul.bf16.gmra.mxu0 %v73
    %v132 = vpop.f32.mrf.mxu0
    %v133 = vadd.f32 %v67, %v132
    %v134 = vpop.f32.mrf.mxu0
    %v135 = vadd.f32 %v67, %v134
    %136 = vdwg.mxu0
    %137 = vst [vmem:[#allocation7] sm:$0xff] %v133
    %138 = vst [vmem:[#allocation7 + $0x8] sm:$0xff] %v135
    // Predicated region
    $region22: #{tpu_custom_call.1} parent=1 // pred_check
      _
    $region23: #{tpu_custom_call.1} parent=1 // pred_check_branch
      %140 = sbr.rel (0) target = $region25
    $region24: #{tpu_custom_call.1} parent=1 // pred_region
      %142 = vsyncadd [#allocation4], 0
      %s143 = sshll.u32 [#allocation7], 4
      %s144 = int_to_ptr.vmem [resolvable:$true] %s143
      %s145 = sshll.u32 %s3, 4
      %s146 = int_to_ptr.hbm [resolvable:$true] %s145
      %151 = dma.vmem_to_hbm [thread:$0]  %s144, 256, %s146, [#allocation4], 128, 128, 8
    $region25: #{tpu_custom_call.1} parent=1 // pred_fallthru
      _
    // Predicated region
    $region26: #{tpu_custom_call.1} parent=1 // pred_check
      _
    $region27: #{tpu_custom_call.1} parent=1 // pred_check_branch
      %153 = sbr.rel (0) target = $region29
    $region28: #{tpu_custom_call.1} parent=1 // pred_region
      %155 = dma.done [#allocation4], 256
    $region29: #{tpu_custom_call.1} parent=1 // pred_fallthru
      _
    %156 = vsyncpa [#allocation3], 1
    %157 = vsyncpa [#allocation6], 1
    %158 = vsyncpa [#allocation4], 1

</llo_original>
